<compile_context>
chip_gen: v6e
topology: v6e:2x2x1
jax: 0.10.0
libtpu: 0.0.40
codegen_flags: <defaults>
</compile_context>

<pallas_src>
import functools

import jax
import jax.numpy as jnp
import numpy as np
from jax.experimental import pallas as pl
from jax.experimental.pallas import tpu as pltpu


_VMEM_LIMIT = 48 * 1024 * 1024  # below v7x's 64 MiB physical VMEM, > defaults


def _pick_tile(dim, prefs):
    """Largest preferred tile that divides `dim`; else the whole axis."""
    for p in prefs:
        if dim % p == 0:
            return p
    return dim


# ----------------------------- linear kernels ------------------------------ #
def _linear_kernel(x_ref, w_ref, o_ref, acc_ref):
    @pl.when(pl.program_id(2) == 0)
    def _():
        acc_ref[...] = jnp.zeros_like(acc_ref)

    acc_ref[...] += jnp.dot(x_ref[...], w_ref[...],
                            preferred_element_type=jnp.float32)

    @pl.when(pl.program_id(2) == pl.num_programs(2) - 1)
    def _():
        o_ref[...] = acc_ref[...].astype(o_ref.dtype)


def _linear_bias_kernel(x_ref, w_ref, b_ref, o_ref, acc_ref):
    @pl.when(pl.program_id(2) == 0)
    def _():
        acc_ref[...] = jnp.zeros_like(acc_ref)

    acc_ref[...] += jnp.dot(x_ref[...], w_ref[...],
                            preferred_element_type=jnp.float32)

    @pl.when(pl.program_id(2) == pl.num_programs(2) - 1)
    def _():
        o_ref[...] = (acc_ref[...] + b_ref[...].astype(jnp.float32)).astype(o_ref.dtype)


def pallas_linear(x2d, w, b=None, *, out_dtype=None):
    """x2d: (M, K), w: (K, N), optional b: (N,) -> (M, N)."""
    M, K = x2d.shape
    K2, N = w.shape
    assert K == K2
    out_dtype = jnp.dtype(out_dtype if out_dtype is not None else x2d.dtype)

    tm = _pick_tile(M, (256, 128, 64, 32, 16, 8))
    tn = _pick_tile(N, (512, 256, 128))
    tk = _pick_tile(K, (512, 256, 128))
    grid = (M // tm, N // tn, K // tk)

    in_specs = [
        pl.BlockSpec((tm, tk), lambda i, j, k: (i, k)),
        pl.BlockSpec((tk, tn), lambda i, j, k: (k, j)),
    ]
    args = [x2d, w]
    if b is not None:
        in_specs.append(pl.BlockSpec((1, tn), lambda i, j, k: (0, j)))
        args.append(b.reshape(1, N))
        kernel = _linear_bias_kernel
    else:
        kernel = _linear_kernel

    bytes_accessed = int(M * K * x2d.dtype.itemsize
                         + K * N * w.dtype.itemsize
                         + M * N * out_dtype.itemsize)
    return pl.pallas_call(
        kernel,
        out_shape=jax.ShapeDtypeStruct((M, N), out_dtype),
        grid=grid,
        in_specs=in_specs,
        out_specs=pl.BlockSpec((tm, tn), lambda i, j, k: (i, j)),
        scratch_shapes=[pltpu.VMEM((tm, tn), jnp.float32)],
        compiler_params=pltpu.CompilerParams(
            dimension_semantics=("parallel", "parallel", "arbitrary"),
            vmem_limit_bytes=_VMEM_LIMIT,
        ),
        cost_estimate=pl.CostEstimate(
            flops=2 * M * N * K, transcendentals=0, bytes_accessed=bytes_accessed),
    )(*args)


# ---------------------------- attention kernel ----------------------------- #
def _attn_kernel(q_ref, kv_ref, o_ref, *, num_heads, scale):
    tq, C = q_ref.shape[1], q_ref.shape[2]
    n_kv = kv_ref.shape[1]
    D = C // num_heads

    # Fold softmax scale into q: O(tq*C) VPU work instead of O(tq*n_kv) per head.
    q = q_ref[0] * scale                                     # (tq, C), compute dtype
    q = q.reshape(tq, num_heads, D).transpose(1, 0, 2)       # (H, tq, D)

    # kv channels are laid out as (2, H, D): k in [0, C), v in [C, 2C).
    kv = kv_ref[0].reshape(n_kv, 2, num_heads, D)
    k = kv[:, 0].transpose(1, 0, 2)                          # (H, n_kv, D)
    v = kv[:, 1].transpose(1, 0, 2)                          # (H, n_kv, D)

    # Head-batched QK^T: contract D directly (no explicit K transpose formed).
    s = jax.lax.dot_general(q, k, (((2,), (2,)), ((0,), (0,))),
                            preferred_element_type=jnp.float32)   # (H, tq, n_kv) f32

    m = jnp.max(s, axis=-1, keepdims=True)
    p = jnp.exp(s - m)
    denom = jnp.sum(p, axis=-1, keepdims=True)
    p = p * pl.reciprocal(denom, approx=True)                # EUP reciprocal + VPU mul

    o = jax.lax.dot_general(p.astype(v.dtype), v, (((2,), (1,)), ((0,), (0,))),
                            preferred_element_type=jnp.float32)   # (H, tq, D) f32

    # Lane-dense store: heads packed back into the channel axis, (B, N, C) layout.
    o_ref[0] = o.transpose(1, 0, 2).reshape(tq, C).astype(o_ref.dtype)


def pallas_mha(q_proj, kv_proj, num_heads, scale):
    """q_proj: (B, N, C), kv_proj: (B, N, 2C) -> attention output (B, N, C)."""
    B, N, C = q_proj.shape
    assert kv_proj.shape == (B, N, 2 * C)

    tq = _pick_tile(N, (512, 256, 128))
    grid = (B, N // tq)

    bytes_accessed = int((B * N * C + B * N * 2 * C + B * N * C)
                         * q_proj.dtype.itemsize)
    return pl.pallas_call(
        functools.partial(_attn_kernel, num_heads=num_heads, scale=scale),
        out_shape=jax.ShapeDtypeStruct((B, N, C), q_proj.dtype),
        grid=grid,
        in_specs=[
            pl.BlockSpec((1, tq, C), lambda b, i: (b, i, 0)),
            pl.BlockSpec((1, N, 2 * C), lambda b, i: (b, 0, 0)),
        ],
        out_specs=pl.BlockSpec((1, tq, C), lambda b, i: (b, i, 0)),
        compiler_params=pltpu.CompilerParams(
            dimension_semantics=("parallel", "parallel"),
            vmem_limit_bytes=_VMEM_LIMIT,
        ),
        cost_estimate=pl.CostEstimate(
            flops=4 * B * N * N * C,
            transcendentals=B * num_heads * N * N,
            bytes_accessed=bytes_accessed),
    )(q_proj, kv_proj)


# ------------------------------ full module -------------------------------- #
def cross_attention(x, y, params, num_heads, compute_dtype=jnp.bfloat16):
    """Equivalent of CrossAttention.forward (qkv_bias=False, dropout=0)."""
    B, N, C = x.shape
    assert C % num_heads == 0
    D = C // num_heads
    scale = D ** (-0.5)
    cd = jnp.dtype(compute_dtype)

    # bf16 MXU inputs, f32 accumulation (softmax stats stay f32 in-kernel).
    x2 = x.reshape(B * N, C).astype(cd)
    y2 = y.reshape(B * N, C).astype(cd)
    wq = params["wq"].astype(cd)
    wkv = params["wkv"].astype(cd)
    wproj = params["wproj"].astype(cd)
    bproj = params["bproj"].astype(jnp.float32)

    # q_linear / kv_linear (no bias in the module) — no zero-bias DMA/add.
    q = pallas_linear(x2, wq).reshape(B, N, C)             # (B, N, C)      channel-packed heads
    kv = pallas_linear(y2, wkv).reshape(B, N, 2 * C)       # (B, N, 2C)     cols [0,C)=k, [C,2C)=v

    # Attention reads/writes the channel-packed layout directly — no XLA transposes.
    o = pallas_mha(q, kv, num_heads, scale)                # (B, N, C)

    # output projection (with bias), f32 output like the PyTorch module.
    out = pallas_linear(o.reshape(B * N, C), wproj, bproj, out_dtype=x.dtype)
    return out.reshape(B, N, C)


# ---------------------------- pure-JAX reference ---------------------------- #
def cross_attention_ref(x, y, params, num_heads, compute_dtype=jnp.bfloat16):
    """Reference mirroring the kernel's bf16-input / f32-accumulate math."""
    cd = jnp.dtype(compute_dtype)
    B, N, C = x.shape
    H = num_heads
    D = C // H
    scale = D ** (-0.5)

    q = jnp.dot(x.astype(cd), params["wq"].astype(cd),
                preferred_element_type=jnp.float32).astype(cd)
    kv = jnp.dot(y.astype(cd), params["wkv"].astype(cd),
                 preferred_element_type=jnp.float32).astype(cd)

    q = (q * jnp.asarray(scale, cd)).reshape(B, N, H, D).transpose(0, 2, 1, 3)
    kv = kv.reshape(B, N, 2, H, D)
    k = kv[:, :, 0].transpose(0, 2, 1, 3)
    v = kv[:, :, 1].transpose(0, 2, 1, 3)

    s = jnp.einsum("bhnd,bhmd->bhnm", q, k, preferred_element_type=jnp.float32)
    p = jax.nn.softmax(s, axis=-1)
    o = jnp.einsum("bhnm,bhmd->bhnd", p.astype(cd), v,
                   preferred_element_type=jnp.float32).astype(cd)
    o = o.transpose(0, 2, 1, 3).reshape(B, N, C)

    out = jnp.dot(o, params["wproj"].astype(cd),
                  preferred_element_type=jnp.float32) + params["bproj"]
    return out.astype(x.dtype)


# ----------------------------------- main ----------------------------------- #
if __name__ == "__main__":
    B, N, C, H = 2, 16, 32, 8

    key = jax.random.PRNGKey(0)
    kx, ky, k1, k2, k3, k4 = jax.random.split(key, 6)

    x = jax.random.normal(kx, (B, N, C), dtype=jnp.float32)
    y = jax.random.normal(ky, (B, N, C), dtype=jnp.float32)

    params = {
        "wq": 0.2 * jax.random.normal(k1, (C, C), dtype=jnp.float32),
        "wkv": 0.2 * jax.random.normal(k2, (C, 2 * C), dtype=jnp.float32),
        "wproj": 0.2 * jax.random.normal(k3, (C, C), dtype=jnp.float32),
        "bproj": 0.2 * jax.random.normal(k4, (C,), dtype=jnp.float32),
    }

    out = cross_attention(x, y, params, H)
    out = jax.block_until_ready(out)

    ref = cross_attention_ref(x, y, params, H)
    assert out.shape == (B, N, C)
    np.testing.assert_allclose(np.asarray(out), np.asarray(ref),
                               atol=1e-2, rtol=2e-2)

    print("KERNEL_OK")
</pallas_src>

<mosaic_0001>
module attributes {stable_mosaic.version = 11 : i64} {
  func.func @_linear_kernel(%arg0: i32, %arg1: i32, %arg2: i32, %arg3: memref<32x32xbf16, #tpu.memory_space<vmem>>, %arg4: memref<32x32xbf16, #tpu.memory_space<vmem>>, %arg5: memref<32x32xbf16, #tpu.memory_space<vmem>>, %arg6: memref<32x32xf32, #tpu.memory_space<vmem>>) attributes {dimension_semantics = [#tpu.dimension_semantics<parallel>, #tpu.dimension_semantics<parallel>, #tpu.dimension_semantics<arbitrary>], iteration_bounds = array<i64: 1, 1, 1>, scalar_prefetch = 0 : i64, scratch_operands = 1 : i64, tpu.core_type = #tpu.core_type<tc>, window_params = [{transform_indices = @transform_0, window_bounds = array<i64: 32, 32>}, {transform_indices = @transform_1, window_bounds = array<i64: 32, 32>}, {transform_indices = @transform_2, window_bounds = array<i64: 32, 32>}]} {
    %c0_i32 = arith.constant 0 : i32
    %0 = arith.cmpi eq, %arg2, %c0_i32 : i32
    %1 = arith.extui %0 : i1 to i32
    %c0_i32_0 = arith.constant 0 : i32
    %2 = arith.cmpi ne, %1, %c0_i32_0 : i32
    scf.if %2 {
      %cst_10 = arith.constant 0.000000e+00 : f32
      %12 = vector.broadcast %cst_10 : f32 to vector<32x32xf32>
      %c0_11 = arith.constant 0 : index
      %c0_12 = arith.constant 0 : index
      %13 = vector.load %arg6[%c0_11, %c0_12] : memref<32x32xf32, #tpu.memory_space<vmem>>, vector<32x32xf32>
      tpu.vector_store %arg6[%c0_11, %c0_12], %12 {strides = array<i32>} : memref<32x32xf32, #tpu.memory_space<vmem>>, vector<32x32xf32>,
    } else {
    }
    %c0 = arith.constant 0 : index
    %c0_1 = arith.constant 0 : index
    %3 = vector.load %arg6[%c0, %c0_1] : memref<32x32xf32, #tpu.memory_space<vmem>>, vector<32x32xf32>
    %c0_2 = arith.constant 0 : index
    %c0_3 = arith.constant 0 : index
    %4 = vector.load %arg3[%c0_2, %c0_3] : memref<32x32xbf16, #tpu.memory_space<vmem>>, vector<32x32xbf16>
    %c0_4 = arith.constant 0 : index
    %c0_5 = arith.constant 0 : index
    %5 = vector.load %arg4[%c0_4, %c0_5] : memref<32x32xbf16, #tpu.memory_space<vmem>>, vector<32x32xbf16>
    %cst = arith.constant dense<0.000000e+00> : vector<32x32xf32>
    %6 = tpu.matmul %4, %5, %cst {dimension_numbers = #tpu.dot_dimension_numbers<[1], [0], [0], [1], [0, 0, 1, 1], [], []>} : vector<32x32xbf16>, vector<32x32xbf16>, vector<32x32xf32> -> vector<32x32xf32>
    %7 = arith.addf %3, %6 : vector<32x32xf32>
    %c0_6 = arith.constant 0 : index
    %c0_7 = arith.constant 0 : index
    %8 = vector.load %arg6[%c0_6, %c0_7] : memref<32x32xf32, #tpu.memory_space<vmem>>, vector<32x32xf32>
    tpu.vector_store %arg6[%c0_6, %c0_7], %7 {strides = array<i32>} : memref<32x32xf32, #tpu.memory_space<vmem>>, vector<32x32xf32>,
    %c0_i32_8 = arith.constant 0 : i32
    %9 = arith.cmpi eq, %arg2, %c0_i32_8 : i32
    %10 = arith.extui %9 : i1 to i32
    %c0_i32_9 = arith.constant 0 : i32
    %11 = arith.cmpi ne, %10, %c0_i32_9 : i32
    scf.if %11 {
      %c0_10 = arith.constant 0 : index
      %c0_11 = arith.constant 0 : index
      %12 = vector.load %arg6[%c0_10, %c0_11] : memref<32x32xf32, #tpu.memory_space<vmem>>, vector<32x32xf32>
      %13 = arith.truncf %12 : vector<32x32xf32> to vector<32x32xbf16>
      %c0_12 = arith.constant 0 : index
      %c0_13 = arith.constant 0 : index
      %14 = vector.load %arg5[%c0_12, %c0_13] : memref<32x32xbf16, #tpu.memory_space<vmem>>, vector<32x32xbf16>
      tpu.vector_store %arg5[%c0_12, %c0_13], %13 {strides = array<i32>} : memref<32x32xbf16, #tpu.memory_space<vmem>>, vector<32x32xbf16>,
    } else {
    }
    return
  }
  func.func @transform_0(%arg0: i32, %arg1: i32, %arg2: i32) -> (i32, i32) {
    %c0_i32 = arith.constant 0 : i32
    return %arg0, %arg2 : i32, i32
  }
  func.func @transform_1(%arg0: i32, %arg1: i32, %arg2: i32) -> (i32, i32) {
    %c0_i32 = arith.constant 0 : i32
    return %arg2, %arg1 : i32, i32
  }
  func.func @transform_2(%arg0: i32, %arg1: i32, %arg2: i32) -> (i32, i32) {
    %c0_i32 = arith.constant 0 : i32
    return %arg0, %arg1 : i32, i32
  }
}

</mosaic_0001>

<llo_original>
// kernel: tpu_custom_call.1
$region0: #{tpu_custom_call.1}
  #allocation0 [shape = 'u32[]', space=smem, size = 0x4, offset = 0x4, fixed_abs, tag = 'smem constant byte address 0x4 - core index']
  #allocation1 [shape = 'u32[144,128]{1,0:T(1,128)}', space=vmem, size = 0x12000, scoped, tag = 'internal scratch']
  #allocation2 [shape = 'f32[32,32]{1,0:T(8,128)}', space=vmem, size = 0x4000, scoped, tag = 'scratch operand']
  %s0 = inlined_call_operand.hbm [shape: bf16[32,32], index: 0, kind: input, shape index: {}]
  %s1 = inlined_call_operand.hbm [shape: bf16[32,32], index: 1, kind: input, shape index: {}]
  %s2 = inlined_call_operand.hbm [shape: bf16[32,32], index: 2, kind: output, shape index: {}]
  %s3 = sld [smem:[#allocation0]]
  $region34: #{tpu_custom_call.1} parent=0
    _
  %s5 = ssub.s32 1, %s3
  %s6 = scalar_select 0, %s5, %s3
  $region1: #{tpu_custom_call.1} parent=0
    #allocation3 [shape = 'u8[8192]{0}', space=vmem, size = 0x2000, scoped, tag = 'input window, operand 0, single buffered']
    #allocation4 [shape = 's32[1]{0}', space=sflag, size = 0x4, scoped, tag = 'scoped memory for tpu_custom_call.1']
    #allocation5 [shape = 's32[1]{0}', space=sflag, size = 0x4, scoped, tag = 'scoped memory for tpu_custom_call.1']
    #allocation6 [shape = 'u8[8192]{0}', space=vmem, size = 0x2000, scoped, tag = 'input window, operand 1, single buffered']
    #allocation7 [shape = 's32[1]{0}', space=sflag, size = 0x4, scoped, tag = 'scoped memory for tpu_custom_call.1']
    #allocation8 [shape = 'u8[8192]{0}', space=vmem, size = 0x2000, scoped, tag = 'output window, operand 0, single buffered']
    %7 = vsyncpa [#allocation4], 0
    %8 = vsyncpa [#allocation7], 0
    %9 = vsyncpa [#allocation5], 0
    // Predicated region
    $region2: #{tpu_custom_call.1} parent=1 // pred_check
      _
    $region3: #{tpu_custom_call.1} parent=1 // pred_check_branch
      %11 = sbr.rel (0) target = $region5
    $region4: #{tpu_custom_call.1} parent=1 // pred_region
      %s13 = ssub.s32 256, 256
      %14 = vsyncadd [#allocation4], %s13
      %s15 = sshll.u32 [#allocation3], 4
      %s16 = int_to_ptr.vmem [resolvable:$true] %s15
      %21 = dma.hbm_to_vmem [thread:$0]  %s0, 256, %s16, [#allocation4], 64, 64, 4
    $region5: #{tpu_custom_call.1} parent=1 // pred_fallthru
      _
    // Predicated region
    $region6: #{tpu_custom_call.1} parent=1 // pred_check
      _
    $region7: #{tpu_custom_call.1} parent=1 // pred_check_branch
      %23 = sbr.rel (0) target = $region9
    $region8: #{tpu_custom_call.1} parent=1 // pred_region
      %s25 = ssub.s32 256, 256
      %26 = vsyncadd [#allocation7], %s25
      %s27 = sshll.u32 [#allocation6], 4
      %s28 = int_to_ptr.vmem [resolvable:$true] %s27
      %33 = dma.hbm_to_vmem [thread:$0]  %s1, 256, %s28, [#allocation7], 64, 64, 4
    $region9: #{tpu_custom_call.1} parent=1 // pred_fallthru
      _
    // Predicated region
    $region10: #{tpu_custom_call.1} parent=1 // pred_check
      _
    $region11: #{tpu_custom_call.1} parent=1 // pred_check_branch
      %35 = sbr.rel (0) target = $region13
    $region12: #{tpu_custom_call.1} parent=1 // pred_region
      %36 = dma.done [#allocation4], 256
    $region13: #{tpu_custom_call.1} parent=1 // pred_fallthru
      _
    // Predicated region
    $region14: #{tpu_custom_call.1} parent=1 // pred_check
      _
    $region15: #{tpu_custom_call.1} parent=1 // pred_check_branch
      %38 = sbr.rel (0) target = $region17
    $region16: #{tpu_custom_call.1} parent=1 // pred_region
      %39 = dma.done [#allocation7], 256
    $region17: #{tpu_custom_call.1} parent=1 // pred_fallthru
      _
    %p41 = scmp.eq.s32.totalorder 0, 0
    // Predicated region
    $region18: #{tpu_custom_call.1} parent=1 // pred_check
      %p42 = pneg %p41
    $region19: #{tpu_custom_call.1} parent=1 // pred_check_branch
      %44 = sbr.rel (%p42) target = $region21
    $region20: #{tpu_custom_call.1} parent=1 // pred_region
      %vm45 = vcmask 261120
      %46 = vst.msk [vmem:[#allocation2] sm:$0xff] %vm45, 0.0
      %47 = vst.msk [vmem:[#allocation2 + $0x8] sm:$0xff] %vm45, 0.0
      %48 = vst.msk [vmem:[#allocation2 + $0x10] sm:$0xff] %vm45, 0.0
      %49 = vst.msk [vmem:[#allocation2 + $0x18] sm:$0xff] %vm45, 0.0
    $region21: #{tpu_custom_call.1} parent=1 // pred_fallthru
      _
    %v50 = vld [vmem:[#allocation2] sm:$0xff]
    %v51 = vld [vmem:[#allocation2 + $0x8] sm:$0xff]
    %v52 = vld [vmem:[#allocation2 + $0x10] sm:$0xff]
    %v53 = vld [vmem:[#allocation2 + $0x18] sm:$0xff]
    %v54 = vld [vmem:[#allocation3] sm:$0xf]
    %v55 = vld [vmem:[#allocation3 + $0x4] sm:$0xf]
    %v56 = vld [vmem:[#allocation3 + $0x8] sm:$0xf]
    %v57 = vld [vmem:[#allocation3 + $0xc] sm:$0xf]
    %v58 = vld [vmem:[#allocation6] sm:$0xf]
    %v59 = vld [vmem:[#allocation6 + $0x4] sm:$0xf]
    %v60 = vld [vmem:[#allocation6 + $0x8] sm:$0xf]
    %v61 = vld [vmem:[#allocation6 + $0xc] sm:$0xf]
    %v66 = vunpack.c.l.b16 %v54
    %v67 = vunpack.c.l.b16 %v55
    %v68 = vunpack.c.l.b16 %v56
    %v69 = vunpack.c.l.b16 %v57
    %v70 = vpack.c.b16 %v67, %v66
    %v71 = vpack.c.b16 %v69, %v68
    %v76 = vunpack.c.l.b16 %v58
    %v77 = vunpack.c.l.b16 %v59
    %v78 = vunpack.c.l.b16 %v60
    %v79 = vunpack.c.l.b16 %v61
    %v80 = vpack.c.b16 %v77, %v76
    %v81 = vpack.c.b16 %v79, %v78
    %vm84 = vcmask 261120
    %v86 = vsel %vm84, %v70, 0
    %v89 = vsel %vm84, %v71, 0
    %91 = vmatprep.subr.bf16.mxu0 0
    %92 = vmatpush1.bf16.msra.mxu0 0
    %93 = vmatprep.subr.bf16.mxu0 0
    %94 = vmatpush1.bf16.msra.mxu0 0
    %95 = vmatprep.subr.bf16.mxu0 0
    %96 = vmatpush1.bf16.msra.mxu0 0
    %97 = vmatprep.subr.bf16.mxu0 0
    %98 = vmatpush1.bf16.msra.mxu0 0
    %99 = vmatprep.subr.bf16.mxu0 0
    %100 = vmatpush1.bf16.msra.mxu0 0
    %101 = vmatprep.subr.bf16.mxu0 0
    %102 = vmatpush1.bf16.msra.mxu0 0
    %103 = vmatprep.subr.bf16.mxu0 0
    %104 = vmatpush1.bf16.msra.mxu0 %v81
    %105 = vmatprep.subr.bf16.mxu0 0
    %106 = vmatpush1.bf16.msra.mxu0 %v80
    %107 = vmatprep.subr.bf16.mxu0 0
    %108 = vmatpush2.bf16.msra.mxu0 0
    %109 = vmatprep.subr.bf16.mxu0 0
    %110 = vmatpush2.bf16.msra.mxu0 0
    %111 = vmatprep.subr.bf16.mxu0 0
    %112 = vmatpush2.bf16.msra.mxu0 0
    %113 = vmatprep.subr.bf16.mxu0 0
    %114 = vmatpush2.bf16.msra.mxu0 0
    %115 = vmatprep.subr.bf16.mxu0 0
    %116 = vmatpush2.bf16.msra.mxu0 0
    %117 = vmatprep.subr.bf16.mxu0 0
    %118 = vmatpush2.bf16.msra.mxu0 0
    %119 = vmatprep.subr.bf16.mxu0 0
    %120 = vmatpush2.bf16.msra.mxu0 0
    %121 = vmatprep.subr.bf16.mxu0 0
    %122 = vmatpush2.bf16.msra.mxu0 0
    %123 = vmatprep.mubr.bf16.mxu0 0
    %124 = vmatmul.mubr.bf16.gmra.mxu0 %v86
    %v125 = vpop.f32.mrf.mxu0
    %v126 = vadd.f32 0.0, %v125
    %v127 = vpop.f32.mrf.mxu0
    %v128 = vpop.f32.mrf.mxu0
    %v129 = vadd.f32 0.0, %v128
    %v130 = vpop.f32.mrf.mxu0
    %131 = vmatprep.mubr.bf16.mxu0 0
    %132 = vmatmul.mubr.bf16.gmra.mxu0 %v89
    %v133 = vpop.f32.mrf.mxu0
    %v134 = vadd.f32 0.0, %v133
    %v135 = vpop.f32.mrf.mxu0
    %v136 = vpop.f32.mrf.mxu0
    %v137 = vadd.f32 0.0, %v136
    %v138 = vpop.f32.mrf.mxu0
    %139 = vdwg.mxu0
    %v140 = vadd.f32 %v50, %v126
    %v141 = vadd.f32 %v51, %v129
    %v142 = vadd.f32 %v52, %v134
    %v143 = vadd.f32 %v53, %v137
    %144 = vst.msk [vmem:[#allocation2] sm:$0xff] %vm84, %v140
    %145 = vst.msk [vmem:[#allocation2 + $0x8] sm:$0xff] %vm84, %v141
    %146 = vst.msk [vmem:[#allocation2 + $0x10] sm:$0xff] %vm84, %v142
    %147 = vst.msk [vmem:[#allocation2 + $0x18] sm:$0xff] %vm84, %v143
    // Predicated region
    $region22: #{tpu_custom_call.1} parent=1 // pred_check
      %p148 = pneg %p41
    $region23: #{tpu_custom_call.1} parent=1 // pred_check_branch
      %150 = sbr.rel (%p148) target = $region25
    $region24: #{tpu_custom_call.1} parent=1 // pred_region
      %v151 = vld [vmem:[#allocation2] sm:$0xff]
      %v152 = vld [vmem:[#allocation2 + $0x8] sm:$0xff]
      %v153 = vld [vmem:[#allocation2 + $0x10] sm:$0xff]
      %v154 = vld [vmem:[#allocation2 + $0x18] sm:$0xff]
      %v155 = vpack.c.bf16 %v152, %v151
      %v156 = vpack.c.bf16 %v154, %v153
      %v159 = vunpack.c.l.b16 %v155
      %v160 = vunpack.c.h.b16 %v155
      %v161 = vunpack.c.l.b16 %v156
      %v162 = vunpack.c.h.b16 %v156
      %v163 = vpack.c.b16 %v159, %v159
      %v164 = vpack.c.b16 %v160, %v160
      %v165 = vpack.c.b16 %v161, %v161
      %v166 = vpack.c.b16 %v162, %v162
      %vm171 = vcmask 257024
      %172 = vst.msk [vmem:[#allocation8] sm:$0xf] %vm171, %v163
      %173 = vst.msk [vmem:[#allocation8 + $0x4] sm:$0xf] %vm171, %v164
      %174 = vst.msk [vmem:[#allocation8 + $0x8] sm:$0xf] %vm171, %v165
      %175 = vst.msk [vmem:[#allocation8 + $0xc] sm:$0xf] %vm171, %v166
    $region25: #{tpu_custom_call.1} parent=1 // pred_fallthru
      _
    // Predicated region
    $region26: #{tpu_custom_call.1} parent=1 // pred_check
      _
    $region27: #{tpu_custom_call.1} parent=1 // pred_check_branch
      %177 = sbr.rel (0) target = $region29
    $region28: #{tpu_custom_call.1} parent=1 // pred_region
      %s179 = ssub.s32 256, 256
      %180 = vsyncadd [#allocation5], %s179
      %s181 = sshll.u32 [#allocation8], 4
      %s182 = int_to_ptr.vmem [resolvable:$true] %s181
      %187 = dma.vmem_to_hbm [thread:$0]  %s182, 256, %s2, [#allocation5], 64, 64, 4
    $region29: #{tpu_custom_call.1} parent=1 // pred_fallthru
      _
    // Predicated region
    $region30: #{tpu_custom_call.1} parent=1 // pred_check
      _
    $region31: #{tpu_custom_call.1} parent=1 // pred_check_branch
      %189 = sbr.rel (0) target = $region33
    $region32: #{tpu_custom_call.1} parent=1 // pred_region
      %190 = dma.done [#allocation5], 256
    $region33: #{tpu_custom_call.1} parent=1 // pred_fallthru
      _
    %191 = vsyncpa [#allocation4], 1
    %192 = vsyncpa [#allocation7], 1
    %193 = vsyncpa [#allocation5], 1

</llo_original>
